<compile_context>
chip_gen: v7x
topology: tpu7x:2x2x1
jax: 0.10.0
libtpu: 0.0.40
codegen_flags: <defaults>
</compile_context>

<pallas_src>
import jax
import jax.numpy as jnp
from jax.experimental import pallas as pl
from jax.experimental.pallas import tpu as pltpu


def _round_up(v, m):
    return ((v + m - 1) // m) * m


def _vae_forward_kernel(
    in_ref,                          # packed [x | m | eps] batch tile
    w1_ref, b1_ref,                  # fc1  ([x|m] -> h)
    w2_ref, b2_ref,                  # fc2  (h -> h)
    w2122_ref, b2122_ref,            # fused fc21|fc22 (h -> 2*z)
    w3_ref, b3_ref,                  # fc3  (z -> h)
    w3b_ref, b3b_ref,                # fc3b ([h3|m] -> h), un-split
    w4_ref, b4_ref,                  # fc4  (h -> num_in)
    out_ref,                         # packed (TILE_B, OUT_PAD) bf16 slab
):
    f32 = jnp.float32
    bf16 = jnp.bfloat16

    num_in = w4_ref.shape[1]
    z_dim = w3_ref.shape[0]

    blk = in_ref[...]                               # (tb, 2*num_in + z_dim) f32
    xm = blk[:, : 2 * num_in].astype(bf16)          # [x | m]
    m_bf = blk[:, num_in : 2 * num_in].astype(bf16)  # m recovered by lane slice
    eps = blk[:, 2 * num_in :]                      # f32 reparam noise

    # ---- encode: h1 = relu(fc1([x, m])) ----
    h1 = jnp.dot(xm, w1_ref[...], preferred_element_type=f32) + b1_ref[...]
    h1 = jnp.maximum(h1, 0.0)

    # ---- h2 = relu(fc2(h1)) ----
    h2 = jnp.dot(h1.astype(bf16), w2_ref[...], preferred_element_type=f32) + b2_ref[...]
    h2 = jnp.maximum(h2, 0.0)

    # ---- mu, logvar from fused fc21|fc22 ----
    ml = jnp.dot(h2.astype(bf16), w2122_ref[...], preferred_element_type=f32) + b2122_ref[...]
    mu = ml[:, :z_dim]
    logvar = ml[:, z_dim:]

    # ---- reparameterize (f32 on VPU/EUP): z = mu + eps * exp(0.5*logvar) ----
    std = jnp.exp(0.5 * logvar)
    z = mu + eps * std

    # ---- decode: h3 = relu(fc3(z)) ----
    h3 = jnp.dot(z.astype(bf16), w3_ref[...], preferred_element_type=f32) + b3_ref[...]
    h3 = jnp.maximum(h3, 0.0)

    # ---- h3b = relu(fc3b([h3, m]))  (single fused matmul) ----
    h3m = jnp.concatenate([h3.astype(bf16), m_bf], axis=-1)
    h3b = jnp.dot(h3m, w3b_ref[...], preferred_element_type=f32) + b3b_ref[...]
    h3b = jnp.maximum(h3b, 0.0)

    # ---- h4 = fc4(h3b)  (mnist=False -> no sigmoid) ----
    h4 = jnp.dot(h3b.astype(bf16), w4_ref[...], preferred_element_type=f32) + b4_ref[...]

    # ---- pack all outputs into one lane-dense slab, single unmasked store ----
    tb = out_ref.shape[0]
    used = num_in + 3 * z_dim
    pieces = [h4, mu, logvar, z]
    pad = out_ref.shape[1] - used
    if pad > 0:
        pieces.append(jnp.zeros((tb, pad), f32))
    out_ref[...] = jnp.concatenate(pieces, axis=-1).astype(out_ref.dtype)


def vae_forward_pallas(x, m, eps, params, tile_b=1024):
    """VAE forward. x, m: (B, num_in) f32; eps: (B, z_dim) f32."""
    B, num_in = x.shape
    z_dim = eps.shape[1]
    h_dim = params["w2"].shape[0]

    # Packed output layout: [recon(num_in) | mu(z) | logvar(z) | z(z) | zero pad]
    out_width = num_in + 3 * z_dim
    out_pad = _round_up(out_width, 128)

    # Batch tiling: large tiles amortize per-grid-step overhead, but keep >= 2
    # grid steps whenever the batch allows so v7x's two TensorCores both work.
    half = _round_up(max(pl.cdiv(B, 2), 1), 8)
    tile_b = max(8, min(tile_b, half))
    b_pad = _round_up(B, tile_b)
    grid = (b_pad // tile_b,)

    # XLA-side (cheap relative to the kernel) packing into ONE streaming input.
    in_width = 2 * num_in + z_dim
    packed_in = jnp.concatenate([x, m, eps], axis=1)
    if b_pad != B:
        packed_in = jnp.pad(packed_in, ((0, b_pad - B), (0, 0)))

    inputs = (
        packed_in,
        params["w1"], params["b1"],
        params["w2"], params["b2"],
        params["w2122"], params["b2122"],
        params["w3"], params["b3"],
        params["w3b"], params["b3b"],
        params["w4"], params["b4"],
    )

    def resident(arr):
        # Full-array block, constant index_map -> stays VMEM-resident across
        # batch tiles (no re-DMA).
        return pl.BlockSpec(arr.shape, lambda i: (0,) * arr.ndim)

    in_specs = [pl.BlockSpec((tile_b, in_width), lambda i: (i, 0))] + [
        resident(a) for a in inputs[1:]
    ]
    out_specs = pl.BlockSpec((tile_b, out_pad), lambda i: (i, 0))

    # Advisory cost hint for XLA scheduling around the tiny custom call.
    flops = 2 * b_pad * (
        2 * num_in * h_dim + h_dim * h_dim + h_dim * 2 * z_dim
        + z_dim * h_dim + (h_dim + num_in) * h_dim + h_dim * num_in
    )
    param_bytes = sum(int(v.size) * v.dtype.itemsize for v in params.values())
    io_bytes = packed_in.size * 4 + b_pad * out_pad * 2
    cost = pl.CostEstimate(
        flops=flops,
        transcendentals=b_pad * z_dim,
        bytes_accessed=param_bytes + io_bytes,
    )

    packed = pl.pallas_call(
        _vae_forward_kernel,
        out_shape=jax.ShapeDtypeStruct((b_pad, out_pad), jnp.bfloat16),
        grid_spec=pltpu.PrefetchScalarGridSpec(
            num_scalar_prefetch=0,
            grid=grid,
            in_specs=in_specs,
            out_specs=out_specs,
        ),
        compiler_params=pltpu.CompilerParams(
            dimension_semantics=("parallel",),
        ),
        cost_estimate=cost,
    )(*inputs)

    packed = packed[:B].astype(jnp.float32)
    recon = packed[:, :num_in]
    mu = packed[:, num_in:num_in + z_dim]
    logvar = packed[:, num_in + z_dim:num_in + 2 * z_dim]
    z = packed[:, num_in + 2 * z_dim:num_in + 3 * z_dim]

    # Glue: same output dicts as the PyTorch module.
    recon_d = {"xobs": recon, "xmis": None, "M_sim_miss": None}
    variational_params = {
        "z_mu": mu,
        "z_logvar": logvar,
        "z_mu_prior": jnp.zeros_like(mu),
        "z_logvar_prior": jnp.zeros_like(logvar),
        "qy": None, "xmis": None, "xmis_mu": None, "xmis_logvar": None,
        "xmis_mu_prior": None, "xmis_logvar_prior": None,
    }
    latent_samples = {"z": z}
    return recon_d, variational_params, latent_samples


def init_params(key, num_in, h_dim, z_dim):
    """Synthetic parameters. Linear weights stored transposed (in, out), bf16.
    Biases kept f32 (added after f32 accumulation)."""
    def lin(k, d_in, d_out):
        kw, kb = jax.random.split(k)
        scale = 1.0 / jnp.sqrt(d_in)
        w = jax.random.uniform(kw, (d_in, d_out), jnp.float32, -scale, scale)
        b = jax.random.uniform(kb, (1, d_out), jnp.float32, -scale, scale)
        return w, b

    ks = jax.random.split(key, 7)
    w1, b1 = lin(ks[0], 2 * num_in, h_dim)             # fc1 on [x | m]
    w2, b2 = lin(ks[1], h_dim, h_dim)
    w21, b21 = lin(ks[2], h_dim, z_dim)
    w22, b22 = lin(ks[3], h_dim, z_dim)
    w3, b3 = lin(ks[4], z_dim, h_dim)
    w3b, b3b = lin(ks[5], h_dim + num_in, h_dim)       # fc3b on [h3 | m]
    w4, b4 = lin(ks[6], h_dim, num_in)

    bf16 = jnp.bfloat16
    return {
        "w1": w1.astype(bf16), "b1": b1,
        "w2": w2.astype(bf16), "b2": b2,
        # fused fc21|fc22
        "w2122": jnp.concatenate([w21, w22], axis=1).astype(bf16),
        "b2122": jnp.concatenate([b21, b22], axis=1),
        "w3": w3.astype(bf16), "b3": b3,
        "w3b": w3b.astype(bf16), "b3b": b3b,            # un-split
        "w4": w4.astype(bf16), "b4": b4,
    }


if __name__ == "__main__":
    # Small shapes consistent with the module: tabular VAE, mnist=False.
    # TODO(synk): test_mode multi-sample (L>1) path and mnist sigmoid branch
    # are not implemented (config modeled: mnist=False, training forward).
    B, num_in, h_dim, z_dim = 8, 16, 32, 8

    key = jax.random.PRNGKey(0)
    k_par, k_x, k_m, k_eps = jax.random.split(key, 4)

    params = init_params(k_par, num_in, h_dim, z_dim)
    x = jax.random.normal(k_x, (B, num_in), jnp.float32)
    m = (jax.random.uniform(k_m, (B, num_in)) > 0.3).astype(jnp.float32)  # miss mask
    eps = jax.random.normal(k_eps, (B, z_dim), jnp.float32)               # reparam noise

    recon, var_params, latents = vae_forward_pallas(x, m, eps, params)
    jax.block_until_ready((recon["xobs"], var_params["z_mu"],
                           var_params["z_logvar"], latents["z"]))

    # Pure-JAX reference of the same (bf16-weight, f32-accumulate) math.
    def ref_forward(x, m, eps, p):
        bf16, f32 = jnp.bfloat16, jnp.float32
        xm = jnp.concatenate([x, m], axis=1).astype(bf16)
        h1 = jax.nn.relu(jnp.dot(xm, p["w1"], preferred_element_type=f32) + p["b1"])
        h2 = jax.nn.relu(jnp.dot(h1.astype(bf16), p["w2"],
                                 preferred_element_type=f32) + p["b2"])
        ml = jnp.dot(h2.astype(bf16), p["w2122"],
                     preferred_element_type=f32) + p["b2122"]
        mu, logvar = ml[:, :z_dim], ml[:, z_dim:]
        z = mu + eps * jnp.exp(0.5 * logvar)
        h3 = jax.nn.relu(jnp.dot(z.astype(bf16), p["w3"],
                                 preferred_element_type=f32) + p["b3"])
        h3m = jnp.concatenate([h3, m], axis=1).astype(bf16)
        h3b = jax.nn.relu(jnp.dot(h3m, p["w3b"], preferred_element_type=f32) + p["b3b"])
        h4 = jnp.dot(h3b.astype(bf16), p["w4"], preferred_element_type=f32) + p["b4"]
        return h4, mu, logvar, z

    r_ref, mu_ref, lv_ref, z_ref = ref_forward(x, m, eps, params)
    # Outputs are stored as bf16 (half writeback); tolerance covers that rounding.
    assert jnp.allclose(recon["xobs"], r_ref, atol=2e-2, rtol=2e-2)
    assert jnp.allclose(var_params["z_mu"], mu_ref, atol=2e-2, rtol=2e-2)
    assert jnp.allclose(var_params["z_logvar"], lv_ref, atol=2e-2, rtol=2e-2)
    assert jnp.allclose(latents["z"], z_ref, atol=2e-2, rtol=2e-2)

    print("KERNEL_OK")
</pallas_src>

<mosaic_0001>
module attributes {stable_mosaic.version = 11 : i64} {
  func.func @_vae_forward_kernel(%arg0: i32, %arg1: memref<8x40xf32, #tpu.memory_space<vmem>>, %arg2: memref<32x32xbf16, #tpu.memory_space<vmem>>, %arg3: memref<1x32xf32, #tpu.memory_space<vmem>>, %arg4: memref<32x32xbf16, #tpu.memory_space<vmem>>, %arg5: memref<1x32xf32, #tpu.memory_space<vmem>>, %arg6: memref<32x16xbf16, #tpu.memory_space<vmem>>, %arg7: memref<1x16xf32, #tpu.memory_space<vmem>>, %arg8: memref<8x32xbf16, #tpu.memory_space<vmem>>, %arg9: memref<1x32xf32, #tpu.memory_space<vmem>>, %arg10: memref<48x32xbf16, #tpu.memory_space<vmem>>, %arg11: memref<1x32xf32, #tpu.memory_space<vmem>>, %arg12: memref<32x16xbf16, #tpu.memory_space<vmem>>, %arg13: memref<1x16xf32, #tpu.memory_space<vmem>>, %arg14: memref<8x128xbf16, #tpu.memory_space<vmem>>) attributes {dimension_semantics = [#tpu.dimension_semantics<parallel>], iteration_bounds = array<i64: 1>, scalar_prefetch = 0 : i64, scratch_operands = 0 : i64, tpu.core_type = #tpu.core_type<tc>, window_params = [{transform_indices = @transform_0, window_bounds = array<i64: 8, 40>}, {pipeline_mode = #tpu.pipeline_mode<synchronous>, transform_indices = @transform_1, window_bounds = array<i64: 32, 32>}, {pipeline_mode = #tpu.pipeline_mode<synchronous>, transform_indices = @transform_2, window_bounds = array<i64: 1, 32>}, {pipeline_mode = #tpu.pipeline_mode<synchronous>, transform_indices = @transform_3, window_bounds = array<i64: 32, 32>}, {pipeline_mode = #tpu.pipeline_mode<synchronous>, transform_indices = @transform_4, window_bounds = array<i64: 1, 32>}, {pipeline_mode = #tpu.pipeline_mode<synchronous>, transform_indices = @transform_5, window_bounds = array<i64: 32, 16>}, {pipeline_mode = #tpu.pipeline_mode<synchronous>, transform_indices = @transform_6, window_bounds = array<i64: 1, 16>}, {pipeline_mode = #tpu.pipeline_mode<synchronous>, transform_indices = @transform_7, window_bounds = array<i64: 8, 32>}, {pipeline_mode = #tpu.pipeline_mode<synchronous>, transform_indices = @transform_8, window_bounds = array<i64: 1, 32>}, {pipeline_mode = #tpu.pipeline_mode<synchronous>, transform_indices = @transform_9, window_bounds = array<i64: 48, 32>}, {pipeline_mode = #tpu.pipeline_mode<synchronous>, transform_indices = @transform_10, window_bounds = array<i64: 1, 32>}, {pipeline_mode = #tpu.pipeline_mode<synchronous>, transform_indices = @transform_11, window_bounds = array<i64: 32, 16>}, {pipeline_mode = #tpu.pipeline_mode<synchronous>, transform_indices = @transform_12, window_bounds = array<i64: 1, 16>}, {transform_indices = @transform_13, window_bounds = array<i64: 8, 128>}]} {
    %c0 = arith.constant 0 : index
    %c0_0 = arith.constant 0 : index
    %0 = vector.load %arg1[%c0, %c0_0] : memref<8x40xf32, #tpu.memory_space<vmem>>, vector<8x40xf32>
    %1 = vector.extract_strided_slice %0 {offsets = [0, 0], sizes = [8, 32], strides = [1, 1]} : vector<8x40xf32> to vector<8x32xf32>
    %2 = arith.truncf %1 : vector<8x32xf32> to vector<8x32xbf16>
    %3 = vector.extract_strided_slice %0 {offsets = [0, 16], sizes = [8, 16], strides = [1, 1]} : vector<8x40xf32> to vector<8x16xf32>
    %4 = arith.truncf %3 : vector<8x16xf32> to vector<8x16xbf16>
    %5 = vector.extract_strided_slice %0 {offsets = [0, 32], sizes = [8, 8], strides = [1, 1]} : vector<8x40xf32> to vector<8x8xf32>
    %c0_1 = arith.constant 0 : index
    %c0_2 = arith.constant 0 : index
    %6 = vector.load %arg2[%c0_1, %c0_2] : memref<32x32xbf16, #tpu.memory_space<vmem>>, vector<32x32xbf16>
    %cst = arith.constant dense<0.000000e+00> : vector<8x32xf32>
    %7 = tpu.matmul %2, %6, %cst {dimension_numbers = #tpu.dot_dimension_numbers<[1], [0], [0], [1], [0, 0, 1, 1], [], []>} : vector<8x32xbf16>, vector<32x32xbf16>, vector<8x32xf32> -> vector<8x32xf32>
    %c0_3 = arith.constant 0 : index
    %c0_4 = arith.constant 0 : index
    %8 = vector.load %arg3[%c0_3, %c0_4] : memref<1x32xf32, #tpu.memory_space<vmem>>, vector<1x32xf32>
    %9 = vector.broadcast %8 : vector<1x32xf32> to vector<8x32xf32>
    %10 = arith.addf %7, %9 : vector<8x32xf32>
    %cst_5 = arith.constant 0.000000e+00 : f32
    %11 = vector.broadcast %cst_5 : f32 to vector<8x32xf32>
    %12 = arith.maximumf %10, %11 : vector<8x32xf32>
    %13 = arith.truncf %12 : vector<8x32xf32> to vector<8x32xbf16>
    %c0_6 = arith.constant 0 : index
    %c0_7 = arith.constant 0 : index
    %14 = vector.load %arg4[%c0_6, %c0_7] : memref<32x32xbf16, #tpu.memory_space<vmem>>, vector<32x32xbf16>
    %cst_8 = arith.constant dense<0.000000e+00> : vector<8x32xf32>
    %15 = tpu.matmul %13, %14, %cst_8 {dimension_numbers = #tpu.dot_dimension_numbers<[1], [0], [0], [1], [0, 0, 1, 1], [], []>} : vector<8x32xbf16>, vector<32x32xbf16>, vector<8x32xf32> -> vector<8x32xf32>
    %c0_9 = arith.constant 0 : index
    %c0_10 = arith.constant 0 : index
    %16 = vector.load %arg5[%c0_9, %c0_10] : memref<1x32xf32, #tpu.memory_space<vmem>>, vector<1x32xf32>
    %17 = vector.broadcast %16 : vector<1x32xf32> to vector<8x32xf32>
    %18 = arith.addf %15, %17 : vector<8x32xf32>
    %cst_11 = arith.constant 0.000000e+00 : f32
    %19 = vector.broadcast %cst_11 : f32 to vector<8x32xf32>
    %20 = arith.maximumf %18, %19 : vector<8x32xf32>
    %21 = arith.truncf %20 : vector<8x32xf32> to vector<8x32xbf16>
    %c0_12 = arith.constant 0 : index
    %c0_13 = arith.constant 0 : index
    %22 = vector.load %arg6[%c0_12, %c0_13] : memref<32x16xbf16, #tpu.memory_space<vmem>>, vector<32x16xbf16>
    %cst_14 = arith.constant dense<0.000000e+00> : vector<8x16xf32>
    %23 = tpu.matmul %21, %22, %cst_14 {dimension_numbers = #tpu.dot_dimension_numbers<[1], [0], [0], [1], [0, 0, 1, 1], [], []>} : vector<8x32xbf16>, vector<32x16xbf16>, vector<8x16xf32> -> vector<8x16xf32>
    %c0_15 = arith.constant 0 : index
    %c0_16 = arith.constant 0 : index
    %24 = vector.load %arg7[%c0_15, %c0_16] : memref<1x16xf32, #tpu.memory_space<vmem>>, vector<1x16xf32>
    %25 = vector.broadcast %24 : vector<1x16xf32> to vector<8x16xf32>
    %26 = arith.addf %23, %25 : vector<8x16xf32>
    %27 = vector.extract_strided_slice %26 {offsets = [0, 0], sizes = [8, 8], strides = [1, 1]} : vector<8x16xf32> to vector<8x8xf32>
    %28 = vector.extract_strided_slice %26 {offsets = [0, 8], sizes = [8, 8], strides = [1, 1]} : vector<8x16xf32> to vector<8x8xf32>
    %cst_17 = arith.constant 5.000000e-01 : f32
    %29 = vector.broadcast %cst_17 : f32 to vector<8x8xf32>
    %30 = arith.mulf %29, %28 : vector<8x8xf32>
    %31 = math.exp %30 : vector<8x8xf32>
    %32 = arith.mulf %5, %31 : vector<8x8xf32>
    %33 = arith.addf %27, %32 : vector<8x8xf32>
    %34 = arith.truncf %33 : vector<8x8xf32> to vector<8x8xbf16>
    %c0_18 = arith.constant 0 : index
    %c0_19 = arith.constant 0 : index
    %35 = vector.load %arg8[%c0_18, %c0_19] : memref<8x32xbf16, #tpu.memory_space<vmem>>, vector<8x32xbf16>
    %cst_20 = arith.constant dense<0.000000e+00> : vector<8x32xf32>
    %36 = tpu.matmul %34, %35, %cst_20 {dimension_numbers = #tpu.dot_dimension_numbers<[1], [0], [0], [1], [0, 0, 1, 1], [], []>} : vector<8x8xbf16>, vector<8x32xbf16>, vector<8x32xf32> -> vector<8x32xf32>
    %c0_21 = arith.constant 0 : index
    %c0_22 = arith.constant 0 : index
    %37 = vector.load %arg9[%c0_21, %c0_22] : memref<1x32xf32, #tpu.memory_space<vmem>>, vector<1x32xf32>
    %38 = vector.broadcast %37 : vector<1x32xf32> to vector<8x32xf32>
    %39 = arith.addf %36, %38 : vector<8x32xf32>
    %cst_23 = arith.constant 0.000000e+00 : f32
    %40 = vector.broadcast %cst_23 : f32 to vector<8x32xf32>
    %41 = arith.maximumf %39, %40 : vector<8x32xf32>
    %42 = arith.truncf %41 : vector<8x32xf32> to vector<8x32xbf16>
    %43 = tpu.concatenate %42, %4 in 1 : vector<8x32xbf16>, vector<8x16xbf16> -> vector<8x48xbf16>
    %c0_24 = arith.constant 0 : index
    %c0_25 = arith.constant 0 : index
    %44 = vector.load %arg10[%c0_24, %c0_25] : memref<48x32xbf16, #tpu.memory_space<vmem>>, vector<48x32xbf16>
    %cst_26 = arith.constant dense<0.000000e+00> : vector<8x32xf32>
    %45 = tpu.matmul %43, %44, %cst_26 {dimension_numbers = #tpu.dot_dimension_numbers<[1], [0], [0], [1], [0, 0, 1, 1], [], []>} : vector<8x48xbf16>, vector<48x32xbf16>, vector<8x32xf32> -> vector<8x32xf32>
    %c0_27 = arith.constant 0 : index
    %c0_28 = arith.constant 0 : index
    %46 = vector.load %arg11[%c0_27, %c0_28] : memref<1x32xf32, #tpu.memory_space<vmem>>, vector<1x32xf32>
    %47 = vector.broadcast %46 : vector<1x32xf32> to vector<8x32xf32>
    %48 = arith.addf %45, %47 : vector<8x32xf32>
    %cst_29 = arith.constant 0.000000e+00 : f32
    %49 = vector.broadcast %cst_29 : f32 to vector<8x32xf32>
    %50 = arith.maximumf %48, %49 : vector<8x32xf32>
    %51 = arith.truncf %50 : vector<8x32xf32> to vector<8x32xbf16>
    %c0_30 = arith.constant 0 : index
    %c0_31 = arith.constant 0 : index
    %52 = vector.load %arg12[%c0_30, %c0_31] : memref<32x16xbf16, #tpu.memory_space<vmem>>, vector<32x16xbf16>
    %cst_32 = arith.constant dense<0.000000e+00> : vector<8x16xf32>
    %53 = tpu.matmul %51, %52, %cst_32 {dimension_numbers = #tpu.dot_dimension_numbers<[1], [0], [0], [1], [0, 0, 1, 1], [], []>} : vector<8x32xbf16>, vector<32x16xbf16>, vector<8x16xf32> -> vector<8x16xf32>
    %c0_33 = arith.constant 0 : index
    %c0_34 = arith.constant 0 : index
    %54 = vector.load %arg13[%c0_33, %c0_34] : memref<1x16xf32, #tpu.memory_space<vmem>>, vector<1x16xf32>
    %55 = vector.broadcast %54 : vector<1x16xf32> to vector<8x16xf32>
    %56 = arith.addf %53, %55 : vector<8x16xf32>
    %cst_35 = arith.constant 0.000000e+00 : f32
    %57 = vector.broadcast %cst_35 : f32 to vector<8x88xf32>
    %58 = tpu.concatenate %56, %27, %28, %33, %57 in 1 : vector<8x16xf32>, vector<8x8xf32>, vector<8x8xf32>, vector<8x8xf32>, vector<8x88xf32> -> vector<8x128xf32>
    %59 = arith.truncf %58 : vector<8x128xf32> to vector<8x128xbf16>
    %c0_36 = arith.constant 0 : index
    %c0_37 = arith.constant 0 : index
    %60 = vector.load %arg14[%c0_36, %c0_37] : memref<8x128xbf16, #tpu.memory_space<vmem>>, vector<8x128xbf16>
    tpu.vector_store %arg14[%c0_36, %c0_37], %59 {strides = array<i32>} : memref<8x128xbf16, #tpu.memory_space<vmem>>, vector<8x128xbf16>,
    return
  }
  func.func @transform_0(%arg0: i32) -> (i32, i32) {
    %c0_i32 = arith.constant 0 : i32
    %c0_i32_0 = arith.constant 0 : i32
    return %arg0, %c0_i32 : i32, i32
  }
  func.func @transform_1(%arg0: i32) -> (i32, i32) {
    %c0_i32 = arith.constant 0 : i32
    %c0_i32_0 = arith.constant 0 : i32
    %c0_i32_1 = arith.constant 0 : i32
    return %c0_i32, %c0_i32_0 : i32, i32
  }
  func.func @transform_2(%arg0: i32) -> (i32, i32) {
    %c0_i32 = arith.constant 0 : i32
    %c0_i32_0 = arith.constant 0 : i32
    %c0_i32_1 = arith.constant 0 : i32
    return %c0_i32, %c0_i32_0 : i32, i32
  }
  func.func @transform_3(%arg0: i32) -> (i32, i32) {
    %c0_i32 = arith.constant 0 : i32
    %c0_i32_0 = arith.constant 0 : i32
    %c0_i32_1 = arith.constant 0 : i32
    return %c0_i32, %c0_i32_0 : i32, i32
  }
  func.func @transform_4(%arg0: i32) -> (i32, i32) {
    %c0_i32 = arith.constant 0 : i32
    %c0_i32_0 = arith.constant 0 : i32
    %c0_i32_1 = arith.constant 0 : i32
    return %c0_i32, %c0_i32_0 : i32, i32
  }
  func.func @transform_5(%arg0: i32) -> (i32, i32) {
    %c0_i32 = arith.constant 0 : i32
    %c0_i32_0 = arith.constant 0 : i32
    %c0_i32_1 = arith.constant 0 : i32
    return %c0_i32, %c0_i32_0 : i32, i32
  }
  func.func @transform_6(%arg0: i32) -> (i32, i32) {
    %c0_i32 = arith.constant 0 : i32
    %c0_i32_0 = arith.constant 0 : i32
    %c0_i32_1 = arith.constant 0 : i32
    return %c0_i32, %c0_i32_0 : i32, i32
  }
  func.func @transform_7(%arg0: i32) -> (i32, i32) {
    %c0_i32 = arith.constant 0 : i32
    %c0_i32_0 = arith.constant 0 : i32
    %c0_i32_1 = arith.constant 0 : i32
    return %c0_i32, %c0_i32_0 : i32, i32
  }
  func.func @transform_8(%arg0: i32) -> (i32, i32) {
    %c0_i32 = arith.constant 0 : i32
    %c0_i32_0 = arith.constant 0 : i32
    %c0_i32_1 = arith.constant 0 : i32
    return %c0_i32, %c0_i32_0 : i32, i32
  }
  func.func @transform_9(%arg0: i32) -> (i32, i32) {
    %c0_i32 = arith.constant 0 : i32
    %c0_i32_0 = arith.constant 0 : i32
    %c0_i32_1 = arith.constant 0 : i32
    return %c0_i32, %c0_i32_0 : i32, i32
  }
  func.func @transform_10(%arg0: i32) -> (i32, i32) {
    %c0_i32 = arith.constant 0 : i32
    %c0_i32_0 = arith.constant 0 : i32
    %c0_i32_1 = arith.constant 0 : i32
    return %c0_i32, %c0_i32_0 : i32, i32
  }
  func.func @transform_11(%arg0: i32) -> (i32, i32) {
    %c0_i32 = arith.constant 0 : i32
    %c0_i32_0 = arith.constant 0 : i32
    %c0_i32_1 = arith.constant 0 : i32
    return %c0_i32, %c0_i32_0 : i32, i32
  }
  func.func @transform_12(%arg0: i32) -> (i32, i32) {
    %c0_i32 = arith.constant 0 : i32
    %c0_i32_0 = arith.constant 0 : i32
    %c0_i32_1 = arith.constant 0 : i32
    return %c0_i32, %c0_i32_0 : i32, i32
  }
  func.func @transform_13(%arg0: i32) -> (i32, i32) {
    %c0_i32 = arith.constant 0 : i32
    %c0_i32_0 = arith.constant 0 : i32
    return %arg0, %c0_i32 : i32, i32
  }
}

</mosaic_0001>

<llo_original>
// kernel: tpu_custom_call.1
$region0: #{tpu_custom_call.1}
  #allocation0 [shape = 'u32[]', space=smem, size = 0x4, offset = 0x4, fixed_abs, tag = 'smem constant byte address 0x4 - core index']
  #allocation1 [shape = 'u32[144,128]{1,0:T(1,128)}', space=vmem, size = 0x12000, scoped, tag = 'internal scratch']
  %s0 = inlined_call_operand.vmem [shape: f32[8,40], index: 0, kind: input, shape index: {}]
  %s1 = inlined_call_operand.vmem [shape: bf16[32,32], index: 1, kind: input, shape index: {}]
  %s2 = inlined_call_operand.vmem [shape: f32[1,32], index: 2, kind: input, shape index: {}]
  %s3 = inlined_call_operand.vmem [shape: bf16[32,32], index: 3, kind: input, shape index: {}]
  %s4 = inlined_call_operand.vmem [shape: f32[1,32], index: 4, kind: input, shape index: {}]
  %s5 = inlined_call_operand.vmem [shape: bf16[32,16], index: 5, kind: input, shape index: {}]
  %s6 = inlined_call_operand.vmem [shape: f32[1,16], index: 6, kind: input, shape index: {}]
  %s7 = inlined_call_operand.vmem [shape: bf16[8,32], index: 7, kind: input, shape index: {}]
  %s8 = inlined_call_operand.vmem [shape: f32[1,32], index: 8, kind: input, shape index: {}]
  %s9 = inlined_call_operand.vmem [shape: bf16[48,32], index: 9, kind: input, shape index: {}]
  %s10 = inlined_call_operand.vmem [shape: f32[1,32], index: 10, kind: input, shape index: {}]
  %s11 = inlined_call_operand.vmem [shape: bf16[32,16], index: 11, kind: input, shape index: {}]
  %s12 = inlined_call_operand.vmem [shape: f32[1,16], index: 12, kind: input, shape index: {}]
  %s13 = inlined_call_operand.hbm [shape: bf16[8,128], index: 13, kind: output, shape index: {}]
  %s14 = sld [smem:[#allocation0]]
  $region62: #{tpu_custom_call.1} parent=0
    _
  %s16 = ssub.s32 1, %s14
  %s17 = scalar_select 0, %s16, %s14
  $region1: #{tpu_custom_call.1} parent=0
    #allocation2 [shape = 'u8[2048]{0}', space=vmem, size = 0x800, scoped, tag = 'output window, operand 0, single buffered']
    #allocation3 [shape = 's32[1]{0}', space=sflag, size = 0x4, scoped, tag = 'scoped memory for tpu_custom_call.1']
    %18 = vsyncpa [#allocation3], 0
    // Predicated region
    $region2: #{tpu_custom_call.1} parent=1 // pred_check
      _
    $region3: #{tpu_custom_call.1} parent=1 // pred_check_branch
      %20 = sbr.rel (0) target = $region5
    $region4: #{tpu_custom_call.1} parent=1 // pred_region
      _
    $region5: #{tpu_custom_call.1} parent=1 // pred_fallthru
      _
    // Predicated region
    $region6: #{tpu_custom_call.1} parent=1 // pred_check
      _
    $region7: #{tpu_custom_call.1} parent=1 // pred_check_branch
      %22 = sbr.rel (0) target = $region9
    $region8: #{tpu_custom_call.1} parent=1 // pred_region
      _
    $region9: #{tpu_custom_call.1} parent=1 // pred_fallthru
      _
    // Predicated region
    $region10: #{tpu_custom_call.1} parent=1 // pred_check
      _
    $region11: #{tpu_custom_call.1} parent=1 // pred_check_branch
      %24 = sbr.rel (0) target = $region13
    $region12: #{tpu_custom_call.1} parent=1 // pred_region
      _
    $region13: #{tpu_custom_call.1} parent=1 // pred_fallthru
      _
    // Predicated region
    $region14: #{tpu_custom_call.1} parent=1 // pred_check
      _
    $region15: #{tpu_custom_call.1} parent=1 // pred_check_branch
      %26 = sbr.rel (0) target = $region17
    $region16: #{tpu_custom_call.1} parent=1 // pred_region
      _
    $region17: #{tpu_custom_call.1} parent=1 // pred_fallthru
      _
    // Predicated region
    $region18: #{tpu_custom_call.1} parent=1 // pred_check
      _
    $region19: #{tpu_custom_call.1} parent=1 // pred_check_branch
      %28 = sbr.rel (0) target = $region21
    $region20: #{tpu_custom_call.1} parent=1 // pred_region
      _
    $region21: #{tpu_custom_call.1} parent=1 // pred_fallthru
      _
    // Predicated region
    $region22: #{tpu_custom_call.1} parent=1 // pred_check
      _
    $region23: #{tpu_custom_call.1} parent=1 // pred_check_branch
      %30 = sbr.rel (0) target = $region25
    $region24: #{tpu_custom_call.1} parent=1 // pred_region
      _
    $region25: #{tpu_custom_call.1} parent=1 // pred_fallthru
      _
    // Predicated region
    $region26: #{tpu_custom_call.1} parent=1 // pred_check
      _
    $region27: #{tpu_custom_call.1} parent=1 // pred_check_branch
      %32 = sbr.rel (0) target = $region29
    $region28: #{tpu_custom_call.1} parent=1 // pred_region
      _
    $region29: #{tpu_custom_call.1} parent=1 // pred_fallthru
      _
    // Predicated region
    $region30: #{tpu_custom_call.1} parent=1 // pred_check
      _
    $region31: #{tpu_custom_call.1} parent=1 // pred_check_branch
      %34 = sbr.rel (0) target = $region33
    $region32: #{tpu_custom_call.1} parent=1 // pred_region
      _
    $region33: #{tpu_custom_call.1} parent=1 // pred_fallthru
      _
    // Predicated region
    $region34: #{tpu_custom_call.1} parent=1 // pred_check
      _
    $region35: #{tpu_custom_call.1} parent=1 // pred_check_branch
      %36 = sbr.rel (0) target = $region37
    $region36: #{tpu_custom_call.1} parent=1 // pred_region
      _
    $region37: #{tpu_custom_call.1} parent=1 // pred_fallthru
      _
    // Predicated region
    $region38: #{tpu_custom_call.1} parent=1 // pred_check
      _
    $region39: #{tpu_custom_call.1} parent=1 // pred_check_branch
      %38 = sbr.rel (0) target = $region41
    $region40: #{tpu_custom_call.1} parent=1 // pred_region
      _
    $region41: #{tpu_custom_call.1} parent=1 // pred_fallthru
      _
    // Predicated region
    $region42: #{tpu_custom_call.1} parent=1 // pred_check
      _
    $region43: #{tpu_custom_call.1} parent=1 // pred_check_branch
      %40 = sbr.rel (0) target = $region45
    $region44: #{tpu_custom_call.1} parent=1 // pred_region
      _
    $region45: #{tpu_custom_call.1} parent=1 // pred_fallthru
      _
    // Predicated region
    $region46: #{tpu_custom_call.1} parent=1 // pred_check
      _
    $region47: #{tpu_custom_call.1} parent=1 // pred_check_branch
      %42 = sbr.rel (0) target = $region49
    $region48: #{tpu_custom_call.1} parent=1 // pred_region
      _
    $region49: #{tpu_custom_call.1} parent=1 // pred_fallthru
      _
    // Predicated region
    $region50: #{tpu_custom_call.1} parent=1 // pred_check
      _
    $region51: #{tpu_custom_call.1} parent=1 // pred_check_branch
      %44 = sbr.rel (0) target = $region53
    $region52: #{tpu_custom_call.1} parent=1 // pred_region
      _
    $region53: #{tpu_custom_call.1} parent=1 // pred_fallthru
      _
    %v46 = vld [vmem:[%s0] sm:$0xff]
    %v47 = vpack.c.bf16 %v46, %v46
    %v48 = vld [vmem:[%s1] sm:$0xf]
    %v49 = vld [vmem:[%s1 + $0x4] sm:$0xf]
    %v50 = vld [vmem:[%s1 + $0x8] sm:$0xf]
    %v51 = vld [vmem:[%s1 + $0xc] sm:$0xf]
    %v52 = vld [vmem:[%s2] sm:$0x1]
    %v54 = vlaneseq
    %v55 = vshrl.u32 %v54, 7
    %v56 = vsub.s32 0, %v55
    %v57 = vrot.slane %v52, %v56
    %v63 = vunpack.c.l.b16 %v48
    %v64 = vunpack.c.l.b16 %v49
    %v65 = vunpack.c.l.b16 %v50
    %v66 = vunpack.c.l.b16 %v51
    %v67 = vpack.c.b16 %v64, %v63
    %v68 = vpack.c.b16 %v66, %v65
    %vm71 = vcmask 261120
    %v73 = vsel %vm71, %v47, 0
    %75 = vmatprep.subr.bf16.mxu0 0
    %76 = vmatpush1.bf16.msra.mxu0 %v67
    %77 = vmatprep.subr.bf16.mxu0 0
    %78 = vmatpush1.bf16.msra.mxu0 %v68
    %79 = vmatprep.subr.bf16.mxu0 0
    %80 = vmatpush1.bf16.msra.mxu0 0
    %81 = vmatprep.subr.bf16.mxu0 0
    %82 = vmatpush1.bf16.msra.mxu0 0
    %83 = vmatprep.subr.bf16.mxu0 0
    %84 = vmatpush1.bf16.msra.mxu0 0
    %85 = vmatprep.subr.bf16.mxu0 0
    %86 = vmatpush1.bf16.msra.mxu0 0
    %87 = vmatprep.subr.bf16.mxu0 0
    %88 = vmatpush1.bf16.msra.mxu0 0
    %89 = vmatprep.subr.bf16.mxu0 0
    %90 = vmatpush1.bf16.msra.mxu0 0
    %91 = vmatprep.subr.bf16.mxu0 0
    %92 = vmatpush1.bf16.msra.mxu0 0
    %93 = vmatprep.subr.bf16.mxu0 0
    %94 = vmatpush1.bf16.msra.mxu0 0
    %95 = vmatprep.subr.bf16.mxu0 0
    %96 = vmatpush1.bf16.msra.mxu0 0
    %97 = vmatprep.subr.bf16.mxu0 0
    %98 = vmatpush1.bf16.msra.mxu0 0
    %99 = vmatprep.subr.bf16.mxu0 0
    %100 = vmatpush1.bf16.msra.mxu0 0
    %101 = vmatprep.subr.bf16.mxu0 0
    %102 = vmatpush1.bf16.msra.mxu0 0
    %103 = vmatprep.subr.bf16.mxu0 0
    %104 = vmatpush1.bf16.msra.mxu0 0
    %105 = vmatprep.subr.bf16.mxu0 0
    %106 = vmatpush1.bf16.msra.mxu0 0
    %107 = vmatprep.mubr.bf16.mxu0 0
    %108 = vmatmul.mubr.bf16.gmra.mrb[0].mxu0 %v73
    %v109 = vpop.f32.mrb[0].mxu0
    %v110 = vadd.f32 %v57, %v109
    %v111 = vpop.f32.mrb[0].mxu0
    %v112 = vpop.f32.mrb[0].mxu0
    %v113 = vpop.f32.mrb[0].mxu0
    %114 = vdwg.mxu0
    %v115 = vmax.f32 %v110, 0.0
    %v116 = vpack.c.bf16 %v115, %v115
    %v117 = vld [vmem:[%s3] sm:$0xf]
    %v118 = vld [vmem:[%s3 + $0x4] sm:$0xf]
    %v119 = vld [vmem:[%s3 + $0x8] sm:$0xf]
    %v120 = vld [vmem:[%s3 + $0xc] sm:$0xf]
    %v121 = vld [vmem:[%s4] sm:$0x1]
    %v123 = vlaneseq
    %v124 = vshrl.u32 %v123, 7
    %v125 = vsub.s32 0, %v124
    %v126 = vrot.slane %v121, %v125
    %v132 = vunpack.c.l.b16 %v117
    %v133 = vunpack.c.l.b16 %v118
    %v134 = vunpack.c.l.b16 %v119
    %v135 = vunpack.c.l.b16 %v120
    %v136 = vpack.c.b16 %v133, %v132
    %v137 = vpack.c.b16 %v135, %v134
    %v141 = vsel %vm71, %v116, 0
    %143 = vmatprep.subr.bf16.mxu0 0
    %144 = vmatpush1.bf16.msra.mxu0 %v136
    %145 = vmatprep.subr.bf16.mxu0 0
    %146 = vmatpush1.bf16.msra.mxu0 %v137
    %147 = vmatprep.subr.bf16.mxu0 0
    %148 = vmatpush1.bf16.msra.mxu0 0
    %149 = vmatprep.subr.bf16.mxu0 0
    %150 = vmatpush1.bf16.msra.mxu0 0
    %151 = vmatprep.subr.bf16.mxu0 0
    %152 = vmatpush1.bf16.msra.mxu0 0
    %153 = vmatprep.subr.bf16.mxu0 0
    %154 = vmatpush1.bf16.msra.mxu0 0
    %155 = vmatprep.subr.bf16.mxu0 0
    %156 = vmatpush1.bf16.msra.mxu0 0
    %157 = vmatprep.subr.bf16.mxu0 0
    %158 = vmatpush1.bf16.msra.mxu0 0
    %159 = vmatprep.subr.bf16.mxu0 0
    %160 = vmatpush1.bf16.msra.mxu0 0
    %161 = vmatprep.subr.bf16.mxu0 0
    %162 = vmatpush1.bf16.msra.mxu0 0
    %163 = vmatprep.subr.bf16.mxu0 0
    %164 = vmatpush1.bf16.msra.mxu0 0
    %165 = vmatprep.subr.bf16.mxu0 0
    %166 = vmatpush1.bf16.msra.mxu0 0
    %167 = vmatprep.subr.bf16.mxu0 0
    %168 = vmatpush1.bf16.msra.mxu0 0
    %169 = vmatprep.subr.bf16.mxu0 0
    %170 = vmatpush1.bf16.msra.mxu0 0
    %171 = vmatprep.subr.bf16.mxu0 0
    %172 = vmatpush1.bf16.msra.mxu0 0
    %173 = vmatprep.subr.bf16.mxu0 0
    %174 = vmatpush1.bf16.msra.mxu0 0
    %175 = vmatprep.mubr.bf16.mxu0 0
    %176 = vmatmul.mubr.bf16.gmra.mrb[0].mxu0 %v141
    %v177 = vpop.f32.mrb[0].mxu0
    %v178 = vadd.f32 %v126, %v177
    %v179 = vpop.f32.mrb[0].mxu0
    %v180 = vpop.f32.mrb[0].mxu0
    %v181 = vpop.f32.mrb[0].mxu0
    %182 = vdwg.mxu0
    %v183 = vmax.f32 %v178, 0.0
    %v184 = vpack.c.bf16 %v183, %v183
    %v185 = vld [vmem:[%s5] sm:$0xf]
    %v186 = vld [vmem:[%s5 + $0x4] sm:$0xf]
    %v187 = vld [vmem:[%s5 + $0x8] sm:$0xf]
    %v188 = vld [vmem:[%s5 + $0xc] sm:$0xf]
    %v189 = vld [vmem:[%s6] sm:$0x1]
    %v191 = vlaneseq
    %v192 = vshrl.u32 %v191, 7
    %v193 = vsub.s32 0, %v192
    %v194 = vrot.slane %v189, %v193
    %v200 = vunpack.c.l.b16 %v185
    %v201 = vunpack.c.l.b16 %v186
    %v202 = vunpack.c.l.b16 %v187
    %v203 = vunpack.c.l.b16 %v188
    %v204 = vpack.c.b16 %v201, %v200
    %v205 = vpack.c.b16 %v203, %v202
    %v209 = vsel %vm71, %v184, 0
    %211 = vmatprep.subr.bf16.mxu0 0
    %212 = vmatpush1.bf16.msra.mxu0 %v204
    %213 = vmatprep.subr.bf16.mxu0 0
    %214 = vmatpush1.bf16.msra.mxu0 %v205
    %215 = vmatprep.subr.bf16.mxu0 0
    %216 = vmatpush1.bf16.msra.mxu0 0
    %217 = vmatprep.subr.bf16.mxu0 0
    %218 = vmatpush1.bf16.msra.mxu0 0
    %219 = vmatprep.subr.bf16.mxu0 0
    %220 = vmatpush1.bf16.msra.mxu0 0
    %221 = vmatprep.subr.bf16.mxu0 0
    %222 = vmatpush1.bf16.msra.mxu0 0
    %223 = vmatprep.subr.bf16.mxu0 0
    %224 = vmatpush1.bf16.msra.mxu0 0
    %225 = vmatprep.subr.bf16.mxu0 0
    %226 = vmatpush1.bf16.msra.mxu0 0
    %227 = vmatprep.subr.bf16.mxu0 0
    %228 = vmatpush1.bf16.msra.mxu0 0
    %229 = vmatprep.subr.bf16.mxu0 0
    %230 = vmatpush1.bf16.msra.mxu0 0
    %231 = vmatprep.subr.bf16.mxu0 0
    %232 = vmatpush1.bf16.msra.mxu0 0
    %233 = vmatprep.subr.bf16.mxu0 0
    %234 = vmatpush1.bf16.msra.mxu0 0
    %235 = vmatprep.subr.bf16.mxu0 0
    %236 = vmatpush1.bf16.msra.mxu0 0
    %237 = vmatprep.subr.bf16.mxu0 0
    %238 = vmatpush1.bf16.msra.mxu0 0
    %239 = vmatprep.subr.bf16.mxu0 0
    %240 = vmatpush1.bf16.msra.mxu0 0
    %241 = vmatprep.subr.bf16.mxu0 0
    %242 = vmatpush1.bf16.msra.mxu0 0
    %243 = vmatprep.mubr.bf16.mxu0 0
    %244 = vmatmul.mubr.bf16.gmra.mrb[0].mxu0 %v209
    %v245 = vpop.f32.mrb[0].mxu0
    %v246 = vadd.f32 %v194, %v245
    %v247 = vpop.f32.mrb[0].mxu0
    %v248 = vpop.f32.mrb[0].mxu0
    %v249 = vpop.f32.mrb[0].mxu0
    %250 = vdwg.mxu0
    %v251 = vmul.f32 %v246, 0.5
    %v252 = vmul.f32 %v251, 1.442695
    %v253 = vpow.pop %v252
    %255 = vrot.lane.b32.xlu0 %v253, 24
    %v256 = vpop.permute.xlu0 %255
    %v258 = vmul.f32 %v46, %v256
    %260 = vrot.lane.b32.xlu0 %v258, 96
    %v261 = vpop.permute.xlu0 %260
    %v263 = vadd.f32 %v246, %v261
    %v264 = vpack.c.bf16 %v263, %v263
    %v265 = vld [vmem:[%s7] sm:$0xf]
    %v266 = vld [vmem:[%s8] sm:$0x1]
    %v268 = vlaneseq
    %v269 = vshrl.u32 %v268, 7
    %v270 = vsub.s32 0, %v269
    %v271 = vrot.slane %v266, %v270
    %vm273 = vcmask 64512
    %v275 = vsel %vm273, %v264, 0
    %vm277 = vcmask 1043456
    %v279 = vsel %vm277, %v265, 0
    %281 = vmatprep.subr.bf16.mxu0 0
    %282 = vmatpush1.bf16.msra.mxu0 %v279
    %283 = vmatprep.subr.bf16.mxu0 0
    %284 = vmatpush1.bf16.msra.mxu0 0
    %285 = vmatprep.subr.bf16.mxu0 0
    %286 = vmatpush1.bf16.msra.mxu0 0
    %287 = vmatprep.subr.bf16.mxu0 0
    %288 = vmatpush1.bf16.msra.mxu0 0
    %289 = vmatprep.subr.bf16.mxu0 0
    %290 = vmatpush1.bf16.msra.mxu0 0
    %291 = vmatprep.subr.bf16.mxu0 0
    %292 = vmatpush1.bf16.msra.mxu0 0
    %293 = vmatprep.subr.bf16.mxu0 0
    %294 = vmatpush1.bf16.msra.mxu0 0
    %295 = vmatprep.subr.bf16.mxu0 0
    %296 = vmatpush1.bf16.msra.mxu0 0
    %297 = vmatprep.subr.bf16.mxu0 0
    %298 = vmatpush1.bf16.msra.mxu0 0
    %299 = vmatprep.subr.bf16.mxu0 0
    %300 = vmatpush1.bf16.msra.mxu0 0
    %301 = vmatprep.subr.bf16.mxu0 0
    %302 = vmatpush1.bf16.msra.mxu0 0
    %303 = vmatprep.subr.bf16.mxu0 0
    %304 = vmatpush1.bf16.msra.mxu0 0
    %305 = vmatprep.subr.bf16.mxu0 0
    %306 = vmatpush1.bf16.msra.mxu0 0
    %307 = vmatprep.subr.bf16.mxu0 0
    %308 = vmatpush1.bf16.msra.mxu0 0
    %309 = vmatprep.subr.bf16.mxu0 0
    %310 = vmatpush1.bf16.msra.mxu0 0
    %311 = vmatprep.subr.bf16.mxu0 0
    %312 = vmatpush1.bf16.msra.mxu0 0
    %313 = vmatprep.mubr.bf16.mxu0 0
    %314 = vmatmul.mubr.bf16.gmra.mrb[0].mxu0 %v275
    %v315 = vpop.f32.mrb[0].mxu0
    %v316 = vadd.f32 %v271, %v315
    %v317 = vpop.f32.mrb[0].mxu0
    %v318 = vpop.f32.mrb[0].mxu0
    %v319 = vpop.f32.mrb[0].mxu0
    %320 = vdwg.mxu0
    %v321 = vmax.f32 %v316, 0.0
    %v322 = vpack.c.bf16 %v321, %v321
    %324 = vrot.lane.b32.xlu0 %v47, 16
    %v325 = vpop.permute.xlu0 %324
    %v328 = vsel %vm71, %v322, %v325
    %v329 = vld [vmem:[%s9] sm:$0xf]
    %v330 = vld [vmem:[%s9 + $0x4] sm:$0xf]
    %v331 = vld [vmem:[%s9 + $0x8] sm:$0xf]
    %v332 = vld [vmem:[%s9 + $0xc] sm:$0xf]
    %v333 = vld [vmem:[%s9 + $0x10] sm:$0xf]
    %v334 = vld [vmem:[%s9 + $0x14] sm:$0xf]
    %v335 = vld [vmem:[%s10] sm:$0x1]
    %v337 = vlaneseq
    %v338 = vshrl.u32 %v337, 7
    %v339 = vsub.s32 0, %v338
    %v340 = vrot.slane %v335, %v339
    %v348 = vunpack.c.l.b16 %v329
    %v349 = vunpack.c.l.b16 %v330
    %v350 = vunpack.c.l.b16 %v331
    %v351 = vunpack.c.l.b16 %v332
    %v352 = vunpack.c.l.b16 %v333
    %v353 = vunpack.c.l.b16 %v334
    %v354 = vpack.c.b16 %v349, %v348
    %v355 = vpack.c.b16 %v351, %v350
    %v356 = vpack.c.b16 %v353, %v352
    %vm360 = vcmask 392192
    %v361 = vsel %vm360, %v328, 0
    %363 = vmatprep.subr.bf16.mxu0 0
    %364 = vmatpush1.bf16.msra.mxu0 %v354
    %365 = vmatprep.subr.bf16.mxu0 0
    %366 = vmatpush1.bf16.msra.mxu0 %v355
    %367 = vmatprep.subr.bf16.mxu0 0
    %368 = vmatpush1.bf16.msra.mxu0 %v356
    %369 = vmatprep.subr.bf16.mxu0 0
    %370 = vmatpush1.bf16.msra.mxu0 0
    %371 = vmatprep.subr.bf16.mxu0 0
    %372 = vmatpush1.bf16.msra.mxu0 0
    %373 = vmatprep.subr.bf16.mxu0 0
    %374 = vmatpush1.bf16.msra.mxu0 0
    %375 = vmatprep.subr.bf16.mxu0 0
    %376 = vmatpush1.bf16.msra.mxu0 0
    %377 = vmatprep.subr.bf16.mxu0 0
    %378 = vmatpush1.bf16.msra.mxu0 0
    %379 = vmatprep.subr.bf16.mxu0 0
    %380 = vmatpush1.bf16.msra.mxu0 0
    %381 = vmatprep.subr.bf16.mxu0 0
    %382 = vmatpush1.bf16.msra.mxu0 0
    %383 = vmatprep.subr.bf16.mxu0 0
    %384 = vmatpush1.bf16.msra.mxu0 0
    %385 = vmatprep.subr.bf16.mxu0 0
    %386 = vmatpush1.bf16.msra.mxu0 0
    %387 = vmatprep.subr.bf16.mxu0 0
    %388 = vmatpush1.bf16.msra.mxu0 0
    %389 = vmatprep.subr.bf16.mxu0 0
    %390 = vmatpush1.bf16.msra.mxu0 0
    %391 = vmatprep.subr.bf16.mxu0 0
    %392 = vmatpush1.bf16.msra.mxu0 0
    %393 = vmatprep.subr.bf16.mxu0 0
    %394 = vmatpush1.bf16.msra.mxu0 0
    %395 = vmatprep.mubr.bf16.mxu0 0
    %396 = vmatmul.mubr.bf16.gmra.mrb[0].mxu0 %v361
    %v397 = vpop.f32.mrb[0].mxu0
    %v398 = vadd.f32 %v340, %v397
    %v399 = vpop.f32.mrb[0].mxu0
    %v400 = vpop.f32.mrb[0].mxu0
    %v401 = vpop.f32.mrb[0].mxu0
    %402 = vdwg.mxu0
    %v403 = vmax.f32 %v398, 0.0
    %v404 = vpack.c.bf16 %v403, %v403
    %v405 = vld [vmem:[%s11] sm:$0xf]
    %v406 = vld [vmem:[%s11 + $0x4] sm:$0xf]
    %v407 = vld [vmem:[%s11 + $0x8] sm:$0xf]
    %v408 = vld [vmem:[%s11 + $0xc] sm:$0xf]
    %v409 = vld [vmem:[%s12] sm:$0x1]
    %v411 = vlaneseq
    %v412 = vshrl.u32 %v411, 7
    %v413 = vsub.s32 0, %v412
    %v414 = vrot.slane %v409, %v413
    %v420 = vunpack.c.l.b16 %v405
    %v421 = vunpack.c.l.b16 %v406
    %v422 = vunpack.c.l.b16 %v407
    %v423 = vunpack.c.l.b16 %v408
    %v424 = vpack.c.b16 %v421, %v420
    %v425 = vpack.c.b16 %v423, %v422
    %v429 = vsel %vm71, %v404, 0
    %431 = vmatprep.subr.bf16.mxu0 0
    %432 = vmatpush1.bf16.msra.mxu0 %v424
    %433 = vmatprep.subr.bf16.mxu0 0
    %434 = vmatpush1.bf16.msra.mxu0 %v425
    %435 = vmatprep.subr.bf16.mxu0 0
    %436 = vmatpush1.bf16.msra.mxu0 0
    %437 = vmatprep.subr.bf16.mxu0 0
    %438 = vmatpush1.bf16.msra.mxu0 0
    %439 = vmatprep.subr.bf16.mxu0 0
    %440 = vmatpush1.bf16.msra.mxu0 0
    %441 = vmatprep.subr.bf16.mxu0 0
    %442 = vmatpush1.bf16.msra.mxu0 0
    %443 = vmatprep.subr.bf16.mxu0 0
    %444 = vmatpush1.bf16.msra.mxu0 0
    %445 = vmatprep.subr.bf16.mxu0 0
    %446 = vmatpush1.bf16.msra.mxu0 0
    %447 = vmatprep.subr.bf16.mxu0 0
    %448 = vmatpush1.bf16.msra.mxu0 0
    %449 = vmatprep.subr.bf16.mxu0 0
    %450 = vmatpush1.bf16.msra.mxu0 0
    %451 = vmatprep.subr.bf16.mxu0 0
    %452 = vmatpush1.bf16.msra.mxu0 0
    %453 = vmatprep.subr.bf16.mxu0 0
    %454 = vmatpush1.bf16.msra.mxu0 0
    %455 = vmatprep.subr.bf16.mxu0 0
    %456 = vmatpush1.bf16.msra.mxu0 0
    %457 = vmatprep.subr.bf16.mxu0 0
    %458 = vmatpush1.bf16.msra.mxu0 0
    %459 = vmatprep.subr.bf16.mxu0 0
    %460 = vmatpush1.bf16.msra.mxu0 0
    %461 = vmatprep.subr.bf16.mxu0 0
    %462 = vmatpush1.bf16.msra.mxu0 0
    %463 = vmatprep.mubr.bf16.mxu0 0
    %464 = vmatmul.mubr.bf16.gmra.mrb[0].mxu0 %v429
    %v465 = vpop.f32.mrb[0].mxu0
    %v466 = vadd.f32 %v414, %v465
    %v467 = vpop.f32.mrb[0].mxu0
    %v468 = vpop.f32.mrb[0].mxu0
    %v469 = vpop.f32.mrb[0].mxu0
    %470 = vdwg.mxu0
    %472 = vrot.lane.b32.xlu0 %v246, 16
    %v473 = vpop.permute.xlu0 %472
    %476 = vrot.lane.b32.xlu0 %v263, 32
    %v477 = vpop.permute.xlu0 %476
    %vm479 = vcmask 130048
    %v480 = vsel %vm479, %v466, %v473
    %vm481 = vcmask 195584
    %v482 = vsel %vm481, %v480, %v473
    %v483 = vsel %vm71, %v482, %v477
    %vm484 = vcmask 326656
    %v485 = vsel %vm484, %v483, 0.0
    %v486 = vpack.c.bf16 %v485, %v485
    %487 = vst [vmem:[#allocation2] sm:$0xf] %v486
    // Predicated region
    $region54: #{tpu_custom_call.1} parent=1 // pred_check
      _
    $region55: #{tpu_custom_call.1} parent=1 // pred_check_branch
      %489 = sbr.rel (0) target = $region57
    $region56: #{tpu_custom_call.1} parent=1 // pred_region
      %s491 = ssub.s32 64, 64
      %492 = vsyncadd [#allocation3], %s491
      %s494 = sshll.u32 [#allocation2], 4
      %s495 = int_to_ptr.vmem [resolvable:$true] %s494
      %497 = dma.vmem_to_hbm [thread:$0]  %s495, 64, %s13, [#allocation3]
    $region57: #{tpu_custom_call.1} parent=1 // pred_fallthru
      _
    // Predicated region
    $region58: #{tpu_custom_call.1} parent=1 // pred_check
      _
    $region59: #{tpu_custom_call.1} parent=1 // pred_check_branch
      %499 = sbr.rel (0) target = $region61
    $region60: #{tpu_custom_call.1} parent=1 // pred_region
      %500 = dma.done [#allocation3], 64
    $region61: #{tpu_custom_call.1} parent=1 // pred_fallthru
      _
    %501 = vsyncpa [#allocation3], 1

</llo_original>
